<compile_context>
chip_gen: v7x
topology: tpu7x:2x2x1
jax: 0.10.0
libtpu: 0.0.40
codegen_flags: <defaults>
</compile_context>

<pallas_src>
import jax
import jax.numpy as jnp
from jax.experimental import pallas as pl
from jax.experimental.pallas import tpu as pltpu


# ---------------------------------------------------------------------------
# Fused Pallas kernel: full GraphSAGE forward in one call
# ---------------------------------------------------------------------------

def fused_graphsage_kernel(adj_ref, pool_ref, x_ref,
                           wl0_ref, wr0_ref, b0_ref,
                           wl1_ref, wr1_ref, b1_ref,
                           wl2_ref, wr2_ref, b2_ref,
                           wl3_ref, wr3_ref, b3_ref,
                           w1_ref, bf1_ref, w2_ref, bf2_ref,
                           out_ref, xcat_ref):
    """out = fc2(relu(fc1(P @ [ A@h_l @ Wl_l + h_l @ Wr_l + b_l ]_cat)))."""
    adj = adj_ref[...]                       # (N, N) bf16 mean-aggregation matrix
    h_bf16 = x_ref[...]                      # (N, F_in) bf16
    hidden = b0_ref.shape[-1]

    layer_refs = ((wl0_ref, wr0_ref, b0_ref), (wl1_ref, wr1_ref, b1_ref),
                  (wl2_ref, wr2_ref, b2_ref), (wl3_ref, wr3_ref, b3_ref))

    for l, (wl_ref, wr_ref, b_ref) in enumerate(layer_refs):   # static unroll
        # neighbor mean aggregation (bf16 MXU, f32 accumulation)
        agg = jnp.dot(adj, h_bf16, preferred_element_type=jnp.float32)     # (N, F)
        # lin_l(agg) + lin_r(h) + b : two MXU pushes into one f32 accumulator,
        # no lane-axis concat of sub-128-wide operands.
        h = (jnp.dot(agg.astype(jnp.bfloat16), wl_ref[...],
                     preferred_element_type=jnp.float32)
             + jnp.dot(h_bf16, wr_ref[...],
                       preferred_element_type=jnp.float32)
             + b_ref[...])                                                  # f32 epilogue
        # write into the lane-dense VMEM slab (zero-cost static slice view)
        xcat_ref[:, l * hidden:(l + 1) * hidden] = h
        h_bf16 = h.astype(jnp.bfloat16)

    # global mean pooling as a matmul: (G, N) @ (N, 4H=128)   (lane-dense slab)
    pooled = jnp.dot(pool_ref[...], xcat_ref[...].astype(jnp.bfloat16),
                     preferred_element_type=jnp.float32)

    # fc1 + ReLU + fc2   (dropout p=0.0 -> identity; epilogue math in f32)
    hfc = jnp.dot(pooled.astype(jnp.bfloat16), w1_ref[...],
                  preferred_element_type=jnp.float32) + bf1_ref[...]
    hfc = jnp.maximum(hfc, 0.0)
    # NOTE: out last dim (=4) is a masked partial store; negligible at this size.
    out_ref[...] = (jnp.dot(hfc.astype(jnp.bfloat16), w2_ref[...],
                            preferred_element_type=jnp.float32) + bf2_ref[...])


# ---------------------------------------------------------------------------
# Wrapper: single pallas_call, all operands in VMEM, bf16 MXU inputs
# ---------------------------------------------------------------------------

def graphsage_forward(x, adj_mean, pool_mat, params):
    n = adj_mean.shape[0]
    g = pool_mat.shape[0]
    hidden = params["layers"][0][0].shape[1]
    num_layers = len(params["layers"])
    out_channels = params["w2"].shape[1]
    bf16 = jnp.bfloat16

    # MXU operands in bf16; biases stay f32 (added on the VPU in f32).
    operands = [adj_mean.astype(bf16), pool_mat.astype(bf16), x.astype(bf16)]
    flops = 0
    for (wl, wr, b) in params["layers"]:
        dim_in = wl.shape[0]
        operands += [wl.astype(bf16), wr.astype(bf16), b]
        flops += 2 * n * n * dim_in                     # A_mean @ h
        flops += 2 * 2 * n * dim_in * hidden            # lin_l + lin_r
    operands += [params["w1"].astype(bf16), params["b1"],
                 params["w2"].astype(bf16), params["b2"]]

    flops += 2 * g * n * (num_layers * hidden)          # pooling matmul
    flops += 2 * g * (num_layers * hidden) * hidden     # fc1
    flops += 2 * g * hidden * out_channels              # fc2

    out_bytes = g * out_channels * 4
    bytes_accessed = sum(int(o.size) * o.dtype.itemsize for o in operands) + out_bytes
    xcat_bytes = n * num_layers * hidden * 4
    vmem_needed = bytes_accessed + xcat_bytes + out_bytes
    vmem_limit = int(min(100 << 20, max(4 << 20, 2 * vmem_needed)))

    vmem_spec = pl.BlockSpec(memory_space=pltpu.MemorySpace.VMEM)

    return pl.pallas_call(
        fused_graphsage_kernel,
        out_shape=jax.ShapeDtypeStruct((g, out_channels), jnp.float32),
        in_specs=[vmem_spec] * len(operands),
        out_specs=vmem_spec,
        scratch_shapes=[pltpu.VMEM((n, num_layers * hidden), jnp.float32)],
        compiler_params=pltpu.CompilerParams(vmem_limit_bytes=vmem_limit),
        cost_estimate=pl.CostEstimate(
            flops=flops, transcendentals=0, bytes_accessed=bytes_accessed),
    )(*operands)


# ---------------------------------------------------------------------------
# Parameter init (deterministic, PyTorch Linear-style uniform bounds)
# ---------------------------------------------------------------------------

def linear_init(key, fan_in, fan_out, bias=True):
    kw, kb = jax.random.split(key)
    bound = 1.0 / jnp.sqrt(jnp.float32(fan_in))
    w = jax.random.uniform(kw, (fan_in, fan_out), jnp.float32, -bound, bound)
    if bias:
        b = jax.random.uniform(kb, (1, fan_out), jnp.float32, -bound, bound)
        return w, b
    return w, None


def make_params(key, in_channels, hidden, num_layers, out_channels):
    params = {"layers": []}
    for i in range(num_layers):
        dim_in = in_channels if i == 0 else hidden
        key, k1, k2 = jax.random.split(key, 3)
        wl, bl = linear_init(k1, dim_in, hidden, bias=True)    # lin_l (with bias)
        wr, _ = linear_init(k2, dim_in, hidden, bias=False)    # lin_r (no bias)
        params["layers"].append((wl, wr, bl))
    key, k1, k2 = jax.random.split(key, 3)
    params["w1"], params["b1"] = linear_init(k1, num_layers * hidden, hidden)
    params["w2"], params["b2"] = linear_init(k2, hidden, out_channels)
    return params


# ---------------------------------------------------------------------------
# Graph densification helpers (glue, plain JAX)
# ---------------------------------------------------------------------------

def build_mean_adj(edge_index, num_nodes):
    """A_mean[t, s] = 1/deg(t) for each edge s->t (PyG mean aggregation)."""
    src, dst = edge_index[0], edge_index[1]
    adj = jnp.zeros((num_nodes, num_nodes), jnp.float32).at[dst, src].add(1.0)
    deg = jnp.clip(adj.sum(axis=1, keepdims=True), 1.0, None)
    return adj / deg


def build_mean_pool(batch, num_graphs):
    """P[g, n] = 1/|V_g| if batch[n] == g else 0 (global_mean_pool)."""
    onehot = (batch[None, :] == jnp.arange(num_graphs)[:, None]).astype(jnp.float32)
    cnt = jnp.clip(onehot.sum(axis=1, keepdims=True), 1.0, None)
    return onehot / cnt


# ---------------------------------------------------------------------------
# Main
# ---------------------------------------------------------------------------

if __name__ == "__main__":
    in_channels, hidden, num_layers, out_channels = 8, 32, 4, 4
    num_nodes, num_graphs = 16, 2

    key = jax.random.PRNGKey(0)
    key, kx = jax.random.split(key)
    x = jax.random.normal(kx, (num_nodes, in_channels), jnp.float32)

    # Two 8-node ring graphs, undirected edges (both directions).
    edges = []
    for gi in range(num_graphs):
        base = gi * 8
        for i in range(8):
            a, b = base + i, base + (i + 1) % 8
            edges.append((a, b))
            edges.append((b, a))
    edge_index = jnp.array(edges, jnp.int32).T                       # (2, 32)
    batch = jnp.repeat(jnp.arange(num_graphs, dtype=jnp.int32), 8)   # (16,)

    adj_mean = build_mean_adj(edge_index, num_nodes)
    pool_mat = build_mean_pool(batch, num_graphs)
    params = make_params(key, in_channels, hidden, num_layers, out_channels)

    out = graphsage_forward(x, adj_mean, pool_mat, params)
    out = jax.block_until_ready(out)

    # Pure-JAX f32 reference for sanity (bf16 MXU operands -> looser tolerance).
    def ref_forward():
        h = x
        hs = []
        for (wl, wr, bl) in params["layers"]:
            h = (adj_mean @ h) @ wl + h @ wr + bl
            hs.append(h)
        xc = jnp.concatenate(hs, axis=1)
        p = pool_mat @ xc
        r = jnp.maximum(p @ params["w1"] + params["b1"], 0.0)
        return r @ params["w2"] + params["b2"]

    ref = ref_forward()
    assert out.shape == (num_graphs, out_channels)
    assert jnp.allclose(out, ref, atol=5e-2, rtol=5e-2)

    print("KERNEL_OK")
</pallas_src>

<mosaic_0001>
module attributes {stable_mosaic.version = 11 : i64} {
  func.func @fused_graphsage_kernel(%arg0: memref<16x16xbf16, #tpu.memory_space<vmem>>, %arg1: memref<2x16xbf16, #tpu.memory_space<vmem>>, %arg2: memref<16x8xbf16, #tpu.memory_space<vmem>>, %arg3: memref<8x32xbf16, #tpu.memory_space<vmem>>, %arg4: memref<8x32xbf16, #tpu.memory_space<vmem>>, %arg5: memref<1x32xf32, #tpu.memory_space<vmem>>, %arg6: memref<32x32xbf16, #tpu.memory_space<vmem>>, %arg7: memref<32x32xbf16, #tpu.memory_space<vmem>>, %arg8: memref<1x32xf32, #tpu.memory_space<vmem>>, %arg9: memref<32x32xbf16, #tpu.memory_space<vmem>>, %arg10: memref<32x32xbf16, #tpu.memory_space<vmem>>, %arg11: memref<1x32xf32, #tpu.memory_space<vmem>>, %arg12: memref<32x32xbf16, #tpu.memory_space<vmem>>, %arg13: memref<32x32xbf16, #tpu.memory_space<vmem>>, %arg14: memref<1x32xf32, #tpu.memory_space<vmem>>, %arg15: memref<128x32xbf16, #tpu.memory_space<vmem>>, %arg16: memref<1x32xf32, #tpu.memory_space<vmem>>, %arg17: memref<32x4xbf16, #tpu.memory_space<vmem>>, %arg18: memref<1x4xf32, #tpu.memory_space<vmem>>, %arg19: memref<2x4xf32, #tpu.memory_space<vmem>>, %arg20: memref<16x128xf32, #tpu.memory_space<vmem>>) attributes {dimension_semantics = [], scalar_prefetch = 0 : i64, scratch_operands = 1 : i64, tpu.core_type = #tpu.core_type<tc>} {
    %c0 = arith.constant 0 : index
    %c0_0 = arith.constant 0 : index
    %0 = vector.load %arg0[%c0, %c0_0] : memref<16x16xbf16, #tpu.memory_space<vmem>>, vector<16x16xbf16>
    %c0_1 = arith.constant 0 : index
    %c0_2 = arith.constant 0 : index
    %1 = vector.load %arg2[%c0_1, %c0_2] : memref<16x8xbf16, #tpu.memory_space<vmem>>, vector<16x8xbf16>
    %cst = arith.constant dense<0.000000e+00> : vector<16x8xf32>
    %2 = tpu.matmul %0, %1, %cst {dimension_numbers = #tpu.dot_dimension_numbers<[1], [0], [0], [1], [0, 0, 1, 1], [], []>} : vector<16x16xbf16>, vector<16x8xbf16>, vector<16x8xf32> -> vector<16x8xf32>
    %3 = arith.truncf %2 : vector<16x8xf32> to vector<16x8xbf16>
    %c0_3 = arith.constant 0 : index
    %c0_4 = arith.constant 0 : index
    %4 = vector.load %arg3[%c0_3, %c0_4] : memref<8x32xbf16, #tpu.memory_space<vmem>>, vector<8x32xbf16>
    %cst_5 = arith.constant dense<0.000000e+00> : vector<16x32xf32>
    %5 = tpu.matmul %3, %4, %cst_5 {dimension_numbers = #tpu.dot_dimension_numbers<[1], [0], [0], [1], [0, 0, 1, 1], [], []>} : vector<16x8xbf16>, vector<8x32xbf16>, vector<16x32xf32> -> vector<16x32xf32>
    %c0_6 = arith.constant 0 : index
    %c0_7 = arith.constant 0 : index
    %6 = vector.load %arg4[%c0_6, %c0_7] : memref<8x32xbf16, #tpu.memory_space<vmem>>, vector<8x32xbf16>
    %cst_8 = arith.constant dense<0.000000e+00> : vector<16x32xf32>
    %7 = tpu.matmul %1, %6, %cst_8 {dimension_numbers = #tpu.dot_dimension_numbers<[1], [0], [0], [1], [0, 0, 1, 1], [], []>} : vector<16x8xbf16>, vector<8x32xbf16>, vector<16x32xf32> -> vector<16x32xf32>
    %8 = arith.addf %5, %7 : vector<16x32xf32>
    %c0_9 = arith.constant 0 : index
    %c0_10 = arith.constant 0 : index
    %9 = vector.load %arg5[%c0_9, %c0_10] : memref<1x32xf32, #tpu.memory_space<vmem>>, vector<1x32xf32>
    %10 = vector.broadcast %9 : vector<1x32xf32> to vector<16x32xf32>
    %11 = arith.addf %8, %10 : vector<16x32xf32>
    %c0_11 = arith.constant 0 : index
    %c0_12 = arith.constant 0 : index
    %12 = vector.load %arg20[%c0_11, %c0_12] : memref<16x128xf32, #tpu.memory_space<vmem>>, vector<16x32xf32>
    tpu.vector_store %arg20[%c0_11, %c0_12], %11 {strides = array<i32>} : memref<16x128xf32, #tpu.memory_space<vmem>>, vector<16x32xf32>,
    %13 = arith.truncf %11 : vector<16x32xf32> to vector<16x32xbf16>
    %cst_13 = arith.constant dense<0.000000e+00> : vector<16x32xf32>
    %14 = tpu.matmul %0, %13, %cst_13 {dimension_numbers = #tpu.dot_dimension_numbers<[1], [0], [0], [1], [0, 0, 1, 1], [], []>} : vector<16x16xbf16>, vector<16x32xbf16>, vector<16x32xf32> -> vector<16x32xf32>
    %15 = arith.truncf %14 : vector<16x32xf32> to vector<16x32xbf16>
    %c0_14 = arith.constant 0 : index
    %c0_15 = arith.constant 0 : index
    %16 = vector.load %arg6[%c0_14, %c0_15] : memref<32x32xbf16, #tpu.memory_space<vmem>>, vector<32x32xbf16>
    %cst_16 = arith.constant dense<0.000000e+00> : vector<16x32xf32>
    %17 = tpu.matmul %15, %16, %cst_16 {dimension_numbers = #tpu.dot_dimension_numbers<[1], [0], [0], [1], [0, 0, 1, 1], [], []>} : vector<16x32xbf16>, vector<32x32xbf16>, vector<16x32xf32> -> vector<16x32xf32>
    %c0_17 = arith.constant 0 : index
    %c0_18 = arith.constant 0 : index
    %18 = vector.load %arg7[%c0_17, %c0_18] : memref<32x32xbf16, #tpu.memory_space<vmem>>, vector<32x32xbf16>
    %cst_19 = arith.constant dense<0.000000e+00> : vector<16x32xf32>
    %19 = tpu.matmul %13, %18, %cst_19 {dimension_numbers = #tpu.dot_dimension_numbers<[1], [0], [0], [1], [0, 0, 1, 1], [], []>} : vector<16x32xbf16>, vector<32x32xbf16>, vector<16x32xf32> -> vector<16x32xf32>
    %20 = arith.addf %17, %19 : vector<16x32xf32>
    %c0_20 = arith.constant 0 : index
    %c0_21 = arith.constant 0 : index
    %21 = vector.load %arg8[%c0_20, %c0_21] : memref<1x32xf32, #tpu.memory_space<vmem>>, vector<1x32xf32>
    %22 = vector.broadcast %21 : vector<1x32xf32> to vector<16x32xf32>
    %23 = arith.addf %20, %22 : vector<16x32xf32>
    %c0_22 = arith.constant 0 : index
    %c32 = arith.constant 32 : index
    %24 = vector.load %arg20[%c0_22, %c32] : memref<16x128xf32, #tpu.memory_space<vmem>>, vector<16x32xf32>
    tpu.vector_store %arg20[%c0_22, %c32], %23 {strides = array<i32>} : memref<16x128xf32, #tpu.memory_space<vmem>>, vector<16x32xf32>,
    %25 = arith.truncf %23 : vector<16x32xf32> to vector<16x32xbf16>
    %cst_23 = arith.constant dense<0.000000e+00> : vector<16x32xf32>
    %26 = tpu.matmul %0, %25, %cst_23 {dimension_numbers = #tpu.dot_dimension_numbers<[1], [0], [0], [1], [0, 0, 1, 1], [], []>} : vector<16x16xbf16>, vector<16x32xbf16>, vector<16x32xf32> -> vector<16x32xf32>
    %27 = arith.truncf %26 : vector<16x32xf32> to vector<16x32xbf16>
    %c0_24 = arith.constant 0 : index
    %c0_25 = arith.constant 0 : index
    %28 = vector.load %arg9[%c0_24, %c0_25] : memref<32x32xbf16, #tpu.memory_space<vmem>>, vector<32x32xbf16>
    %cst_26 = arith.constant dense<0.000000e+00> : vector<16x32xf32>
    %29 = tpu.matmul %27, %28, %cst_26 {dimension_numbers = #tpu.dot_dimension_numbers<[1], [0], [0], [1], [0, 0, 1, 1], [], []>} : vector<16x32xbf16>, vector<32x32xbf16>, vector<16x32xf32> -> vector<16x32xf32>
    %c0_27 = arith.constant 0 : index
    %c0_28 = arith.constant 0 : index
    %30 = vector.load %arg10[%c0_27, %c0_28] : memref<32x32xbf16, #tpu.memory_space<vmem>>, vector<32x32xbf16>
    %cst_29 = arith.constant dense<0.000000e+00> : vector<16x32xf32>
    %31 = tpu.matmul %25, %30, %cst_29 {dimension_numbers = #tpu.dot_dimension_numbers<[1], [0], [0], [1], [0, 0, 1, 1], [], []>} : vector<16x32xbf16>, vector<32x32xbf16>, vector<16x32xf32> -> vector<16x32xf32>
    %32 = arith.addf %29, %31 : vector<16x32xf32>
    %c0_30 = arith.constant 0 : index
    %c0_31 = arith.constant 0 : index
    %33 = vector.load %arg11[%c0_30, %c0_31] : memref<1x32xf32, #tpu.memory_space<vmem>>, vector<1x32xf32>
    %34 = vector.broadcast %33 : vector<1x32xf32> to vector<16x32xf32>
    %35 = arith.addf %32, %34 : vector<16x32xf32>
    %c0_32 = arith.constant 0 : index
    %c64 = arith.constant 64 : index
    %36 = vector.load %arg20[%c0_32, %c64] : memref<16x128xf32, #tpu.memory_space<vmem>>, vector<16x32xf32>
    tpu.vector_store %arg20[%c0_32, %c64], %35 {strides = array<i32>} : memref<16x128xf32, #tpu.memory_space<vmem>>, vector<16x32xf32>,
    %37 = arith.truncf %35 : vector<16x32xf32> to vector<16x32xbf16>
    %cst_33 = arith.constant dense<0.000000e+00> : vector<16x32xf32>
    %38 = tpu.matmul %0, %37, %cst_33 {dimension_numbers = #tpu.dot_dimension_numbers<[1], [0], [0], [1], [0, 0, 1, 1], [], []>} : vector<16x16xbf16>, vector<16x32xbf16>, vector<16x32xf32> -> vector<16x32xf32>
    %39 = arith.truncf %38 : vector<16x32xf32> to vector<16x32xbf16>
    %c0_34 = arith.constant 0 : index
    %c0_35 = arith.constant 0 : index
    %40 = vector.load %arg12[%c0_34, %c0_35] : memref<32x32xbf16, #tpu.memory_space<vmem>>, vector<32x32xbf16>
    %cst_36 = arith.constant dense<0.000000e+00> : vector<16x32xf32>
    %41 = tpu.matmul %39, %40, %cst_36 {dimension_numbers = #tpu.dot_dimension_numbers<[1], [0], [0], [1], [0, 0, 1, 1], [], []>} : vector<16x32xbf16>, vector<32x32xbf16>, vector<16x32xf32> -> vector<16x32xf32>
    %c0_37 = arith.constant 0 : index
    %c0_38 = arith.constant 0 : index
    %42 = vector.load %arg13[%c0_37, %c0_38] : memref<32x32xbf16, #tpu.memory_space<vmem>>, vector<32x32xbf16>
    %cst_39 = arith.constant dense<0.000000e+00> : vector<16x32xf32>
    %43 = tpu.matmul %37, %42, %cst_39 {dimension_numbers = #tpu.dot_dimension_numbers<[1], [0], [0], [1], [0, 0, 1, 1], [], []>} : vector<16x32xbf16>, vector<32x32xbf16>, vector<16x32xf32> -> vector<16x32xf32>
    %44 = arith.addf %41, %43 : vector<16x32xf32>
    %c0_40 = arith.constant 0 : index
    %c0_41 = arith.constant 0 : index
    %45 = vector.load %arg14[%c0_40, %c0_41] : memref<1x32xf32, #tpu.memory_space<vmem>>, vector<1x32xf32>
    %46 = vector.broadcast %45 : vector<1x32xf32> to vector<16x32xf32>
    %47 = arith.addf %44, %46 : vector<16x32xf32>
    %c0_42 = arith.constant 0 : index
    %c96 = arith.constant 96 : index
    %48 = vector.load %arg20[%c0_42, %c96] : memref<16x128xf32, #tpu.memory_space<vmem>>, vector<16x32xf32>
    tpu.vector_store %arg20[%c0_42, %c96], %47 {strides = array<i32>} : memref<16x128xf32, #tpu.memory_space<vmem>>, vector<16x32xf32>,
    %c0_43 = arith.constant 0 : index
    %c0_44 = arith.constant 0 : index
    %49 = vector.load %arg1[%c0_43, %c0_44] : memref<2x16xbf16, #tpu.memory_space<vmem>>, vector<2x16xbf16>
    %c0_45 = arith.constant 0 : index
    %c0_46 = arith.constant 0 : index
    %50 = vector.load %arg20[%c0_45, %c0_46] : memref<16x128xf32, #tpu.memory_space<vmem>>, vector<16x128xf32>
    %51 = arith.truncf %50 : vector<16x128xf32> to vector<16x128xbf16>
    %cst_47 = arith.constant dense<0.000000e+00> : vector<2x128xf32>
    %52 = tpu.matmul %49, %51, %cst_47 {dimension_numbers = #tpu.dot_dimension_numbers<[1], [0], [0], [1], [0, 0, 1, 1], [], []>} : vector<2x16xbf16>, vector<16x128xbf16>, vector<2x128xf32> -> vector<2x128xf32>
    %53 = arith.truncf %52 : vector<2x128xf32> to vector<2x128xbf16>
    %c0_48 = arith.constant 0 : index
    %c0_49 = arith.constant 0 : index
    %54 = vector.load %arg15[%c0_48, %c0_49] : memref<128x32xbf16, #tpu.memory_space<vmem>>, vector<128x32xbf16>
    %cst_50 = arith.constant dense<0.000000e+00> : vector<2x32xf32>
    %55 = tpu.matmul %53, %54, %cst_50 {dimension_numbers = #tpu.dot_dimension_numbers<[1], [0], [0], [1], [0, 0, 1, 1], [], []>} : vector<2x128xbf16>, vector<128x32xbf16>, vector<2x32xf32> -> vector<2x32xf32>
    %c0_51 = arith.constant 0 : index
    %c0_52 = arith.constant 0 : index
    %56 = vector.load %arg16[%c0_51, %c0_52] : memref<1x32xf32, #tpu.memory_space<vmem>>, vector<1x32xf32>
    %57 = vector.broadcast %56 : vector<1x32xf32> to vector<2x32xf32>
    %58 = arith.addf %55, %57 : vector<2x32xf32>
    %cst_53 = arith.constant 0.000000e+00 : f32
    %59 = vector.broadcast %cst_53 : f32 to vector<2x32xf32>
    %60 = arith.maximumf %58, %59 : vector<2x32xf32>
    %61 = arith.truncf %60 : vector<2x32xf32> to vector<2x32xbf16>
    %c0_54 = arith.constant 0 : index
    %c0_55 = arith.constant 0 : index
    %62 = vector.load %arg17[%c0_54, %c0_55] : memref<32x4xbf16, #tpu.memory_space<vmem>>, vector<32x4xbf16>
    %cst_56 = arith.constant dense<0.000000e+00> : vector<2x4xf32>
    %63 = tpu.matmul %61, %62, %cst_56 {dimension_numbers = #tpu.dot_dimension_numbers<[1], [0], [0], [1], [0, 0, 1, 1], [], []>} : vector<2x32xbf16>, vector<32x4xbf16>, vector<2x4xf32> -> vector<2x4xf32>
    %c0_57 = arith.constant 0 : index
    %c0_58 = arith.constant 0 : index
    %64 = vector.load %arg18[%c0_57, %c0_58] : memref<1x4xf32, #tpu.memory_space<vmem>>, vector<1x4xf32>
    %65 = vector.broadcast %64 : vector<1x4xf32> to vector<2x4xf32>
    %66 = arith.addf %63, %65 : vector<2x4xf32>
    %c0_59 = arith.constant 0 : index
    %c0_60 = arith.constant 0 : index
    %67 = vector.load %arg19[%c0_59, %c0_60] : memref<2x4xf32, #tpu.memory_space<vmem>>, vector<2x4xf32>
    tpu.vector_store %arg19[%c0_59, %c0_60], %66 {strides = array<i32>} : memref<2x4xf32, #tpu.memory_space<vmem>>, vector<2x4xf32>,
    return
  }
}

</mosaic_0001>

<llo_original>
// kernel: tpu_custom_call.1
$region0: #{tpu_custom_call.1}
  #allocation0 [shape = 'u32[]', space=smem, size = 0x4, offset = 0x4, fixed_abs, tag = 'smem constant byte address 0x4 - core index']
  #allocation1 [shape = 'u32[144,128]{1,0:T(1,128)}', space=vmem, size = 0x12000, scoped, tag = 'internal scratch']
  #allocation2 [shape = 'f32[16,128]{1,0:T(8,128)}', space=vmem, size = 0x2000, scoped, tag = 'scratch operand']
  %s0 = inlined_call_operand.hbm [shape: bf16[16,16], index: 0, kind: input, shape index: {}]
  %s1 = inlined_call_operand.vmem [shape: bf16[2,16], index: 1, kind: input, shape index: {}]
  %s2 = inlined_call_operand.vmem [shape: bf16[16,8], index: 2, kind: input, shape index: {}]
  %s3 = inlined_call_operand.vmem [shape: bf16[8,32], index: 3, kind: input, shape index: {}]
  %s4 = inlined_call_operand.vmem [shape: bf16[8,32], index: 4, kind: input, shape index: {}]
  %s5 = inlined_call_operand.vmem [shape: f32[1,32], index: 5, kind: input, shape index: {}]
  %s6 = inlined_call_operand.vmem [shape: bf16[32,32], index: 6, kind: input, shape index: {}]
  %s7 = inlined_call_operand.vmem [shape: bf16[32,32], index: 7, kind: input, shape index: {}]
  %s8 = inlined_call_operand.vmem [shape: f32[1,32], index: 8, kind: input, shape index: {}]
  %s9 = inlined_call_operand.vmem [shape: bf16[32,32], index: 9, kind: input, shape index: {}]
  %s10 = inlined_call_operand.vmem [shape: bf16[32,32], index: 10, kind: input, shape index: {}]
  %s11 = inlined_call_operand.vmem [shape: f32[1,32], index: 11, kind: input, shape index: {}]
  %s12 = inlined_call_operand.vmem [shape: bf16[32,32], index: 12, kind: input, shape index: {}]
  %s13 = inlined_call_operand.vmem [shape: bf16[32,32], index: 13, kind: input, shape index: {}]
  %s14 = inlined_call_operand.vmem [shape: f32[1,32], index: 14, kind: input, shape index: {}]
  %s15 = inlined_call_operand.vmem [shape: bf16[128,32], index: 15, kind: input, shape index: {}]
  %s16 = inlined_call_operand.vmem [shape: f32[1,32], index: 16, kind: input, shape index: {}]
  %s17 = inlined_call_operand.vmem [shape: bf16[32,4], index: 17, kind: input, shape index: {}]
  %s18 = inlined_call_operand.vmem [shape: f32[1,4], index: 18, kind: input, shape index: {}]
  %s19 = inlined_call_operand.hbm [shape: f32[2,4], index: 19, kind: output, shape index: {}]
  %s20 = sld [smem:[#allocation0]]
  $region90: #{tpu_custom_call.1} parent=0
    _
  %s22 = ssub.s32 1, %s20
  %s23 = scalar_select 0, %s22, %s20
  $region1: #{tpu_custom_call.1} parent=0
    #allocation3 [shape = 'u8[4096]{0}', space=vmem, size = 0x1000, scoped, tag = 'input window, operand 0, single buffered']
    #allocation4 [shape = 's32[1]{0}', space=sflag, size = 0x4, scoped, tag = 'scoped memory for tpu_custom_call.1']
    #allocation5 [shape = 's32[1]{0}', space=sflag, size = 0x4, scoped, tag = 'scoped memory for tpu_custom_call.1']
    #allocation6 [shape = 'u8[1024]{0}', space=vmem, size = 0x400, scoped, tag = 'output window, operand 0, single buffered']
    %24 = vsyncpa [#allocation4], 0
    %25 = vsyncpa [#allocation5], 0
    // Predicated region
    $region2: #{tpu_custom_call.1} parent=1 // pred_check
      _
    $region3: #{tpu_custom_call.1} parent=1 // pred_check_branch
      %27 = sbr.rel (0) target = $region5
    $region4: #{tpu_custom_call.1} parent=1 // pred_region
      %s29 = ssub.s32 128, 128
      %30 = vsyncadd [#allocation4], %s29
      %s31 = sshll.u32 [#allocation3], 4
      %s32 = int_to_ptr.vmem [resolvable:$true] %s31
      %37 = dma.hbm_to_vmem [thread:$0]  %s0, 128, %s32, [#allocation4], 64, 64, 4
    $region5: #{tpu_custom_call.1} parent=1 // pred_fallthru
      _
    // Predicated region
    $region6: #{tpu_custom_call.1} parent=1 // pred_check
      _
    $region7: #{tpu_custom_call.1} parent=1 // pred_check_branch
      %39 = sbr.rel (0) target = $region9
    $region8: #{tpu_custom_call.1} parent=1 // pred_region
      _
    $region9: #{tpu_custom_call.1} parent=1 // pred_fallthru
      _
    // Predicated region
    $region10: #{tpu_custom_call.1} parent=1 // pred_check
      _
    $region11: #{tpu_custom_call.1} parent=1 // pred_check_branch
      %41 = sbr.rel (0) target = $region13
    $region12: #{tpu_custom_call.1} parent=1 // pred_region
      _
    $region13: #{tpu_custom_call.1} parent=1 // pred_fallthru
      _
    // Predicated region
    $region14: #{tpu_custom_call.1} parent=1 // pred_check
      _
    $region15: #{tpu_custom_call.1} parent=1 // pred_check_branch
      %43 = sbr.rel (0) target = $region17
    $region16: #{tpu_custom_call.1} parent=1 // pred_region
      _
    $region17: #{tpu_custom_call.1} parent=1 // pred_fallthru
      _
    // Predicated region
    $region18: #{tpu_custom_call.1} parent=1 // pred_check
      _
    $region19: #{tpu_custom_call.1} parent=1 // pred_check_branch
      %45 = sbr.rel (0) target = $region21
    $region20: #{tpu_custom_call.1} parent=1 // pred_region
      _
    $region21: #{tpu_custom_call.1} parent=1 // pred_fallthru
      _
    // Predicated region
    $region22: #{tpu_custom_call.1} parent=1 // pred_check
      _
    $region23: #{tpu_custom_call.1} parent=1 // pred_check_branch
      %47 = sbr.rel (0) target = $region25
    $region24: #{tpu_custom_call.1} parent=1 // pred_region
      _
    $region25: #{tpu_custom_call.1} parent=1 // pred_fallthru
      _
    // Predicated region
    $region26: #{tpu_custom_call.1} parent=1 // pred_check
      _
    $region27: #{tpu_custom_call.1} parent=1 // pred_check_branch
      %49 = sbr.rel (0) target = $region29
    $region28: #{tpu_custom_call.1} parent=1 // pred_region
      _
    $region29: #{tpu_custom_call.1} parent=1 // pred_fallthru
      _
    // Predicated region
    $region30: #{tpu_custom_call.1} parent=1 // pred_check
      _
    $region31: #{tpu_custom_call.1} parent=1 // pred_check_branch
      %51 = sbr.rel (0) target = $region33
    $region32: #{tpu_custom_call.1} parent=1 // pred_region
      _
    $region33: #{tpu_custom_call.1} parent=1 // pred_fallthru
      _
    // Predicated region
    $region34: #{tpu_custom_call.1} parent=1 // pred_check
      _
    $region35: #{tpu_custom_call.1} parent=1 // pred_check_branch
      %53 = sbr.rel (0) target = $region37
    $region36: #{tpu_custom_call.1} parent=1 // pred_region
      _
    $region37: #{tpu_custom_call.1} parent=1 // pred_fallthru
      _
    // Predicated region
    $region38: #{tpu_custom_call.1} parent=1 // pred_check
      _
    $region39: #{tpu_custom_call.1} parent=1 // pred_check_branch
      %55 = sbr.rel (0) target = $region41
    $region40: #{tpu_custom_call.1} parent=1 // pred_region
      _
    $region41: #{tpu_custom_call.1} parent=1 // pred_fallthru
      _
    // Predicated region
    $region42: #{tpu_custom_call.1} parent=1 // pred_check
      _
    $region43: #{tpu_custom_call.1} parent=1 // pred_check_branch
      %57 = sbr.rel (0) target = $region45
    $region44: #{tpu_custom_call.1} parent=1 // pred_region
      _
    $region45: #{tpu_custom_call.1} parent=1 // pred_fallthru
      _
    // Predicated region
    $region46: #{tpu_custom_call.1} parent=1 // pred_check
      _
    $region47: #{tpu_custom_call.1} parent=1 // pred_check_branch
      %59 = sbr.rel (0) target = $region49
    $region48: #{tpu_custom_call.1} parent=1 // pred_region
      _
    $region49: #{tpu_custom_call.1} parent=1 // pred_fallthru
      _
    // Predicated region
    $region50: #{tpu_custom_call.1} parent=1 // pred_check
      _
    $region51: #{tpu_custom_call.1} parent=1 // pred_check_branch
      %61 = sbr.rel (0) target = $region53
    $region52: #{tpu_custom_call.1} parent=1 // pred_region
      _
    $region53: #{tpu_custom_call.1} parent=1 // pred_fallthru
      _
    // Predicated region
    $region54: #{tpu_custom_call.1} parent=1 // pred_check
      _
    $region55: #{tpu_custom_call.1} parent=1 // pred_check_branch
      %63 = sbr.rel (0) target = $region57
    $region56: #{tpu_custom_call.1} parent=1 // pred_region
      _
    $region57: #{tpu_custom_call.1} parent=1 // pred_fallthru
      _
    // Predicated region
    $region58: #{tpu_custom_call.1} parent=1 // pred_check
      _
    $region59: #{tpu_custom_call.1} parent=1 // pred_check_branch
      %65 = sbr.rel (0) target = $region61
    $region60: #{tpu_custom_call.1} parent=1 // pred_region
      _
    $region61: #{tpu_custom_call.1} parent=1 // pred_fallthru
      _
    // Predicated region
    $region62: #{tpu_custom_call.1} parent=1 // pred_check
      _
    $region63: #{tpu_custom_call.1} parent=1 // pred_check_branch
      %67 = sbr.rel (0) target = $region65
    $region64: #{tpu_custom_call.1} parent=1 // pred_region
      _
    $region65: #{tpu_custom_call.1} parent=1 // pred_fallthru
      _
    // Predicated region
    $region66: #{tpu_custom_call.1} parent=1 // pred_check
      _
    $region67: #{tpu_custom_call.1} parent=1 // pred_check_branch
      %69 = sbr.rel (0) target = $region69
    $region68: #{tpu_custom_call.1} parent=1 // pred_region
      _
    $region69: #{tpu_custom_call.1} parent=1 // pred_fallthru
      _
    // Predicated region
    $region70: #{tpu_custom_call.1} parent=1 // pred_check
      _
    $region71: #{tpu_custom_call.1} parent=1 // pred_check_branch
      %71 = sbr.rel (0) target = $region73
    $region72: #{tpu_custom_call.1} parent=1 // pred_region
      _
    $region73: #{tpu_custom_call.1} parent=1 // pred_fallthru
      _
    // Predicated region
    $region74: #{tpu_custom_call.1} parent=1 // pred_check
      _
    $region75: #{tpu_custom_call.1} parent=1 // pred_check_branch
      %73 = sbr.rel (0) target = $region77
    $region76: #{tpu_custom_call.1} parent=1 // pred_region
      _
    $region77: #{tpu_custom_call.1} parent=1 // pred_fallthru
      _
    // Predicated region
    $region78: #{tpu_custom_call.1} parent=1 // pred_check
      _
    $region79: #{tpu_custom_call.1} parent=1 // pred_check_branch
      %75 = sbr.rel (0) target = $region81
    $region80: #{tpu_custom_call.1} parent=1 // pred_region
      %76 = dma.done [#allocation4], 128
    $region81: #{tpu_custom_call.1} parent=1 // pred_fallthru
      _
    %v78 = vld [vmem:[#allocation3] sm:$0xf]
    %v79 = vld [vmem:[#allocation3 + $0x4] sm:$0xf]
    %v80 = vld [vmem:[%s2] sm:$0xf]
    %v81 = vld [vmem:[%s2 + $0x4] sm:$0xf]
    %v84 = vunpack.c.l.b16 %v78
    %v85 = vunpack.c.l.b16 %v79
    %v86 = vpack.c.b16 %v85, %v84
    %v89 = vunpack.c.l.b16 %v80
    %v90 = vunpack.c.l.b16 %v81
    %v91 = vpack.c.b16 %v90, %v89
    %vm93 = vcmask 130048
    %v95 = vsel %vm93, %v86, 0
    %97 = vmatprep.subr.bf16.mxu0 0
    %98 = vmatpush1.bf16.msra.mxu0 %v91
    %99 = vmatprep.subr.bf16.mxu0 0
    %100 = vmatpush1.bf16.msra.mxu0 0
    %101 = vmatprep.subr.bf16.mxu0 0
    %102 = vmatpush1.bf16.msra.mxu0 0
    %103 = vmatprep.subr.bf16.mxu0 0
    %104 = vmatpush1.bf16.msra.mxu0 0
    %105 = vmatprep.subr.bf16.mxu0 0
    %106 = vmatpush1.bf16.msra.mxu0 0
    %107 = vmatprep.subr.bf16.mxu0 0
    %108 = vmatpush1.bf16.msra.mxu0 0
    %109 = vmatprep.subr.bf16.mxu0 0
    %110 = vmatpush1.bf16.msra.mxu0 0
    %111 = vmatprep.subr.bf16.mxu0 0
    %112 = vmatpush1.bf16.msra.mxu0 0
    %113 = vmatprep.subr.bf16.mxu0 0
    %114 = vmatpush1.bf16.msra.mxu0 0
    %115 = vmatprep.subr.bf16.mxu0 0
    %116 = vmatpush1.bf16.msra.mxu0 0
    %117 = vmatprep.subr.bf16.mxu0 0
    %118 = vmatpush1.bf16.msra.mxu0 0
    %119 = vmatprep.subr.bf16.mxu0 0
    %120 = vmatpush1.bf16.msra.mxu0 0
    %121 = vmatprep.subr.bf16.mxu0 0
    %122 = vmatpush1.bf16.msra.mxu0 0
    %123 = vmatprep.subr.bf16.mxu0 0
    %124 = vmatpush1.bf16.msra.mxu0 0
    %125 = vmatprep.subr.bf16.mxu0 0
    %126 = vmatpush1.bf16.msra.mxu0 0
    %127 = vmatprep.subr.bf16.mxu0 0
    %128 = vmatpush1.bf16.msra.mxu0 0
    %129 = vmatprep.mubr.bf16.mxu0 0
    %130 = vmatmul.mubr.bf16.gmra.mrb[0].mxu0 %v95
    %v131 = vpop.f32.mrb[0].mxu0
    %v132 = vadd.f32 0.0, %v131
    %v133 = vpop.f32.mrb[0].mxu0
    %v134 = vpop.f32.mrb[0].mxu0
    %v135 = vadd.f32 0.0, %v134
    %v136 = vpop.f32.mrb[0].mxu0
    %137 = vdwg.mxu0
    %v138 = vpack.c.bf16 %v135, %v132
    %v139 = vld [vmem:[%s3] sm:$0xf]
    %v140 = vld [vmem:[%s4] sm:$0xf]
    %vm141 = vcmask 64512
    %v143 = vsel %vm141, %v91, 0
    %vm145 = vcmask 1043456
    %v147 = vsel %vm145, %v140, 0
    %149 = vmatprep.subr.bf16.mxu0 0
    %150 = vmatpush1.bf16.msra.mxu0 %v147
    %151 = vmatprep.subr.bf16.mxu0 0
    %152 = vmatpush1.bf16.msra.mxu0 0
    %153 = vmatprep.subr.bf16.mxu0 0
    %154 = vmatpush1.bf16.msra.mxu0 0
    %155 = vmatprep.subr.bf16.mxu0 0
    %156 = vmatpush1.bf16.msra.mxu0 0
    %157 = vmatprep.subr.bf16.mxu0 0
    %158 = vmatpush1.bf16.msra.mxu0 0
    %159 = vmatprep.subr.bf16.mxu0 0
    %160 = vmatpush1.bf16.msra.mxu0 0
    %161 = vmatprep.subr.bf16.mxu0 0
    %162 = vmatpush1.bf16.msra.mxu0 0
    %163 = vmatprep.subr.bf16.mxu0 0
    %164 = vmatpush1.bf16.msra.mxu0 0
    %165 = vmatprep.subr.bf16.mxu0 0
    %166 = vmatpush1.bf16.msra.mxu0 0
    %167 = vmatprep.subr.bf16.mxu0 0
    %168 = vmatpush1.bf16.msra.mxu0 0
    %169 = vmatprep.subr.bf16.mxu0 0
    %170 = vmatpush1.bf16.msra.mxu0 0
    %171 = vmatprep.subr.bf16.mxu0 0
    %172 = vmatpush1.bf16.msra.mxu0 0
    %173 = vmatprep.subr.bf16.mxu0 0
    %174 = vmatpush1.bf16.msra.mxu0 0
    %175 = vmatprep.subr.bf16.mxu0 0
    %176 = vmatpush1.bf16.msra.mxu0 0
    %177 = vmatprep.subr.bf16.mxu0 0
    %178 = vmatpush1.bf16.msra.mxu0 0
    %179 = vmatprep.subr.bf16.mxu0 0
    %180 = vmatpush1.bf16.msra.mxu0 0
    %181 = vmatprep.mubr.bf16.mxu0 0
    %182 = vmatmul.mubr.bf16.gmra.mrb[0].mxu0 %v143
    %v183 = vpop.f32.mrb[0].mxu0
    %v184 = vadd.f32 0.0, %v183
    %v185 = vpop.f32.mrb[0].mxu0
    %v186 = vpop.f32.mrb[0].mxu0
    %v187 = vadd.f32 0.0, %v186
    %v188 = vpop.f32.mrb[0].mxu0
    %189 = vdwg.mxu0
    %v191 = vsel %vm141, %v138, 0
    %v194 = vsel %vm145, %v139, 0
    %196 = vmatprep.subr.bf16.mxu0 0
    %197 = vmatpush1.bf16.msra.mxu0 %v194
    %198 = vmatprep.subr.bf16.mxu0 0
    %199 = vmatpush1.bf16.msra.mxu0 0
    %200 = vmatprep.subr.bf16.mxu0 0
    %201 = vmatpush1.bf16.msra.mxu0 0
    %202 = vmatprep.subr.bf16.mxu0 0
    %203 = vmatpush1.bf16.msra.mxu0 0
    %204 = vmatprep.subr.bf16.mxu0 0
    %205 = vmatpush1.bf16.msra.mxu0 0
    %206 = vmatprep.subr.bf16.mxu0 0
    %207 = vmatpush1.bf16.msra.mxu0 0
    %208 = vmatprep.subr.bf16.mxu0 0
    %209 = vmatpush1.bf16.msra.mxu0 0
    %210 = vmatprep.subr.bf16.mxu0 0
    %211 = vmatpush1.bf16.msra.mxu0 0
    %212 = vmatprep.subr.bf16.mxu0 0
    %213 = vmatpush1.bf16.msra.mxu0 0
    %214 = vmatprep.subr.bf16.mxu0 0
    %215 = vmatpush1.bf16.msra.mxu0 0
    %216 = vmatprep.subr.bf16.mxu0 0
    %217 = vmatpush1.bf16.msra.mxu0 0
    %218 = vmatprep.subr.bf16.mxu0 0
    %219 = vmatpush1.bf16.msra.mxu0 0
    %220 = vmatprep.subr.bf16.mxu0 0
    %221 = vmatpush1.bf16.msra.mxu0 0
    %222 = vmatprep.subr.bf16.mxu0 0
    %223 = vmatpush1.bf16.msra.mxu0 0
    %224 = vmatprep.subr.bf16.mxu0 0
    %225 = vmatpush1.bf16.msra.mxu0 0
    %226 = vmatprep.subr.bf16.mxu0 0
    %227 = vmatpush1.bf16.msra.mxu0 0
    %228 = vmatprep.mubr.bf16.mxu0 0
    %229 = vmatmul.mubr.bf16.gmra.mrb[0].mxu0 %v191
    %v230 = vpop.f32.mrb[0].mxu0
    %v231 = vadd.f32 %v184, %v230
    %v232 = vpop.f32.mrb[0].mxu0
    %v233 = vpop.f32.mrb[0].mxu0
    %v234 = vadd.f32 %v187, %v233
    %v235 = vpop.f32.mrb[0].mxu0
    %236 = vdwg.mxu0
    %v237 = vld [vmem:[%s5] sm:$0x1]
    %v239 = vlaneseq
    %v240 = vshrl.u32 %v239, 7
    %v241 = vsub.s32 0, %v240
    %v242 = vrot.slane %v237, %v241
    %v244 = vadd.f32 %v231, %v242
    %v245 = vadd.f32 %v234, %v242
    %vm246 = vcmask 261120
    %247 = vst.msk [vmem:[#allocation2] sm:$0xff] %vm246, %v244
    %248 = vst.msk [vmem:[#allocation2 + $0x8] sm:$0xff] %vm246, %v245
    %v249 = vpack.c.bf16 %v245, %v244
    %250 = vmatprep.subr.bf16.mxu0 0
    %251 = vmatpush1.bf16.msra.mxu0 %v249
    %252 = vmatprep.subr.bf16.mxu0 0
    %253 = vmatpush1.bf16.msra.mxu0 0
    %254 = vmatprep.subr.bf16.mxu0 0
    %255 = vmatpush1.bf16.msra.mxu0 0
    %256 = vmatprep.subr.bf16.mxu0 0
    %257 = vmatpush1.bf16.msra.mxu0 0
    %258 = vmatprep.subr.bf16.mxu0 0
    %259 = vmatpush1.bf16.msra.mxu0 0
    %260 = vmatprep.subr.bf16.mxu0 0
    %261 = vmatpush1.bf16.msra.mxu0 0
    %262 = vmatprep.subr.bf16.mxu0 0
    %263 = vmatpush1.bf16.msra.mxu0 0
    %264 = vmatprep.subr.bf16.mxu0 0
    %265 = vmatpush1.bf16.msra.mxu0 0
    %266 = vmatprep.subr.bf16.mxu0 0
    %267 = vmatpush1.bf16.msra.mxu0 0
    %268 = vmatprep.subr.bf16.mxu0 0
    %269 = vmatpush1.bf16.msra.mxu0 0
    %270 = vmatprep.subr.bf16.mxu0 0
    %271 = vmatpush1.bf16.msra.mxu0 0
    %272 = vmatprep.subr.bf16.mxu0 0
    %273 = vmatpush1.bf16.msra.mxu0 0
    %274 = vmatprep.subr.bf16.mxu0 0
    %275 = vmatpush1.bf16.msra.mxu0 0
    %276 = vmatprep.subr.bf16.mxu0 0
    %277 = vmatpush1.bf16.msra.mxu0 0
    %278 = vmatprep.subr.bf16.mxu0 0
    %279 = vmatpush1.bf16.msra.mxu0 0
    %280 = vmatprep.subr.bf16.mxu0 0
    %281 = vmatpush1.bf16.msra.mxu0 0
    %282 = vmatprep.mubr.bf16.mxu0 0
    %283 = vmatmul.mubr.bf16.gmra.mrb[0].mxu0 %v95
    %v284 = vpop.f32.mrb[0].mxu0
    %v285 = vadd.f32 0.0, %v284
    %v286 = vpop.f32.mrb[0].mxu0
    %v287 = vpop.f32.mrb[0].mxu0
    %v288 = vadd.f32 0.0, %v287
    %v289 = vpop.f32.mrb[0].mxu0
    %290 = vdwg.mxu0
    %v291 = vpack.c.bf16 %v288, %v285
    %v292 = vld [vmem:[%s6] sm:$0xf]
    %v293 = vld [vmem:[%s6 + $0x4] sm:$0xf]
    %v294 = vld [vmem:[%s6 + $0x8] sm:$0xf]
    %v295 = vld [vmem:[%s6 + $0xc] sm:$0xf]
    %v296 = vld [vmem:[%s7] sm:$0xf]
    %v297 = vld [vmem:[%s7 + $0x4] sm:$0xf]
    %v298 = vld [vmem:[%s7 + $0x8] sm:$0xf]
    %v299 = vld [vmem:[%s7 + $0xc] sm:$0xf]
    %v304 = vunpack.c.l.b16 %v296
    %v305 = vunpack.c.l.b16 %v297
    %v306 = vunpack.c.l.b16 %v298
    %v307 = vunpack.c.l.b16 %v299
    %v308 = vpack.c.b16 %v305, %v304
    %v309 = vpack.c.b16 %v307, %v306
    %v313 = vsel %vm246, %v249, 0
    %315 = vmatprep.subr.bf16.mxu0 0
    %316 = vmatpush1.bf16.msra.mxu0 %v308
    %317 = vmatprep.subr.bf16.mxu0 0
    %318 = vmatpush1.bf16.msra.mxu0 %v309
    %319 = vmatprep.subr.bf16.mxu0 0
    %320 = vmatpush1.bf16.msra.mxu0 0
    %321 = vmatprep.subr.bf16.mxu0 0
    %322 = vmatpush1.bf16.msra.mxu0 0
    %323 = vmatprep.subr.bf16.mxu0 0
    %324 = vmatpush1.bf16.msra.mxu0 0
    %325 = vmatprep.subr.bf16.mxu0 0
    %326 = vmatpush1.bf16.msra.mxu0 0
    %327 = vmatprep.subr.bf16.mxu0 0
    %328 = vmatpush1.bf16.msra.mxu0 0
    %329 = vmatprep.subr.bf16.mxu0 0
    %330 = vmatpush1.bf16.msra.mxu0 0
    %331 = vmatprep.subr.bf16.mxu0 0
    %332 = vmatpush1.bf16.msra.mxu0 0
    %333 = vmatprep.subr.bf16.mxu0 0
    %334 = vmatpush1.bf16.msra.mxu0 0
    %335 = vmatprep.subr.bf16.mxu0 0
    %336 = vmatpush1.bf16.msra.mxu0 0
    %337 = vmatprep.subr.bf16.mxu0 0
    %338 = vmatpush1.bf16.msra.mxu0 0
    %339 = vmatprep.subr.bf16.mxu0 0
    %340 = vmatpush1.bf16.msra.mxu0 0
    %341 = vmatprep.subr.bf16.mxu0 0
    %342 = vmatpush1.bf16.msra.mxu0 0
    %343 = vmatprep.subr.bf16.mxu0 0
    %344 = vmatpush1.bf16.msra.mxu0 0
    %345 = vmatprep.subr.bf16.mxu0 0
    %346 = vmatpush1.bf16.msra.mxu0 0
    %347 = vmatprep.mubr.bf16.mxu0 0
    %348 = vmatmul.mubr.bf16.gmra.mrb[0].mxu0 %v313
    %v349 = vpop.f32.mrb[0].mxu0
    %v350 = vadd.f32 0.0, %v349
    %v351 = vpop.f32.mrb[0].mxu0
    %v352 = vpop.f32.mrb[0].mxu0
    %v353 = vadd.f32 0.0, %v352
    %v354 = vpop.f32.mrb[0].mxu0
    %355 = vdwg.mxu0
    %v360 = vunpack.c.l.b16 %v292
    %v361 = vunpack.c.l.b16 %v293
    %v362 = vunpack.c.l.b16 %v294
    %v363 = vunpack.c.l.b16 %v295
    %v364 = vpack.c.b16 %v361, %v360
    %v365 = vpack.c.b16 %v363, %v362
    %v369 = vsel %vm246, %v291, 0
    %371 = vmatprep.subr.bf16.mxu0 0
    %372 = vmatpush1.bf16.msra.mxu0 %v364
    %373 = vmatprep.subr.bf16.mxu0 0
    %374 = vmatpush1.bf16.msra.mxu0 %v365
    %375 = vmatprep.subr.bf16.mxu0 0
    %376 = vmatpush1.bf16.msra.mxu0 0
    %377 = vmatprep.subr.bf16.mxu0 0
    %378 = vmatpush1.bf16.msra.mxu0 0
    %379 = vmatprep.subr.bf16.mxu0 0
    %380 = vmatpush1.bf16.msra.mxu0 0
    %381 = vmatprep.subr.bf16.mxu0 0
    %382 = vmatpush1.bf16.msra.mxu0 0
    %383 = vmatprep.subr.bf16.mxu0 0
    %384 = vmatpush1.bf16.msra.mxu0 0
    %385 = vmatprep.subr.bf16.mxu0 0
    %386 = vmatpush1.bf16.msra.mxu0 0
    %387 = vmatprep.subr.bf16.mxu0 0
    %388 = vmatpush1.bf16.msra.mxu0 0
    %389 = vmatprep.subr.bf16.mxu0 0
    %390 = vmatpush1.bf16.msra.mxu0 0
    %391 = vmatprep.subr.bf16.mxu0 0
    %392 = vmatpush1.bf16.msra.mxu0 0
    %393 = vmatprep.subr.bf16.mxu0 0
    %394 = vmatpush1.bf16.msra.mxu0 0
    %395 = vmatprep.subr.bf16.mxu0 0
    %396 = vmatpush1.bf16.msra.mxu0 0
    %397 = vmatprep.subr.bf16.mxu0 0
    %398 = vmatpush1.bf16.msra.mxu0 0
    %399 = vmatprep.subr.bf16.mxu0 0
    %400 = vmatpush1.bf16.msra.mxu0 0
    %401 = vmatprep.subr.bf16.mxu0 0
    %402 = vmatpush1.bf16.msra.mxu0 0
    %403 = vmatprep.mubr.bf16.mxu0 0
    %404 = vmatmul.mubr.bf16.gmra.mrb[0].mxu0 %v369
    %v405 = vpop.f32.mrb[0].mxu0
    %v406 = vadd.f32 %v350, %v405
    %v407 = vpop.f32.mrb[0].mxu0
    %v408 = vpop.f32.mrb[0].mxu0
    %v409 = vadd.f32 %v353, %v408
    %v410 = vpop.f32.mrb[0].mxu0
    %411 = vdwg.mxu0
    %v412 = vld [vmem:[%s8] sm:$0x1]
    %v414 = vlaneseq
    %v415 = vshrl.u32 %v414, 7
    %v416 = vsub.s32 0, %v415
    %v417 = vrot.slane %v412, %v416
    %v419 = vadd.f32 %v406, %v417
    %v420 = vadd.f32 %v409, %v417
    %423 = vrot.lane.b32.xlu0 %v419, 32
    %v424 = vpop.permute.xlu0 %423
    %425 = vrot.lane.b32.xlu0 %v420, 32
    %v426 = vpop.permute.xlu0 %425
    %vm429 = vcmask 523520
    %430 = vst.msk [vmem:[#allocation2] sm:$0xff] %vm429, %v424
    %431 = vst.msk [vmem:[#allocation2 + $0x8] sm:$0xff] %vm429, %v426
    %v432 = vpack.c.bf16 %v420, %v419
    %433 = vmatprep.subr.bf16.mxu0 0
    %434 = vmatpush1.bf16.msra.mxu0 %v432
    %435 = vmatprep.subr.bf16.mxu0 0
    %436 = vmatpush1.bf16.msra.mxu0 0
    %437 = vmatprep.subr.bf16.mxu0 0
    %438 = vmatpush1.bf16.msra.mxu0 0
    %439 = vmatprep.subr.bf16.mxu0 0
    %440 = vmatpush1.bf16.msra.mxu0 0
    %441 = vmatprep.subr.bf16.mxu0 0
    %442 = vmatpush1.bf16.msra.mxu0 0
    %443 = vmatprep.subr.bf16.mxu0 0
    %444 = vmatpush1.bf16.msra.mxu0 0
    %445 = vmatprep.subr.bf16.mxu0 0
    %446 = vmatpush1.bf16.msra.mxu0 0
    %447 = vmatprep.subr.bf16.mxu0 0
    %448 = vmatpush1.bf16.msra.mxu0 0
    %449 = vmatprep.subr.bf16.mxu0 0
    %450 = vmatpush1.bf16.msra.mxu0 0
    %451 = vmatprep.subr.bf16.mxu0 0
    %452 = vmatpush1.bf16.msra.mxu0 0
    %453 = vmatprep.subr.bf16.mxu0 0
    %454 = vmatpush1.bf16.msra.mxu0 0
    %455 = vmatprep.subr.bf16.mxu0 0
    %456 = vmatpush1.bf16.msra.mxu0 0
    %457 = vmatprep.subr.bf16.mxu0 0
    %458 = vmatpush1.bf16.msra.mxu0 0
    %459 = vmatprep.subr.bf16.mxu0 0
    %460 = vmatpush1.bf16.msra.mxu0 0
    %461 = vmatprep.subr.bf16.mxu0 0
    %462 = vmatpush1.bf16.msra.mxu0 0
    %463 = vmatprep.subr.bf16.mxu0 0
    %464 = vmatpush1.bf16.msra.mxu0 0
    %465 = vmatprep.mubr.bf16.mxu0 0
    %466 = vmatmul.mubr.bf16.gmra.mrb[0].mxu0 %v95
    %v467 = vpop.f32.mrb[0].mxu0
    %v468 = vadd.f32 0.0, %v467
    %v469 = vpop.f32.mrb[0].mxu0
    %v470 = vpop.f32.mrb[0].mxu0
    %v471 = vadd.f32 0.0, %v470
    %v472 = vpop.f32.mrb[0].mxu0
    %473 = vdwg.mxu0
    %v474 = vpack.c.bf16 %v471, %v468
    %v475 = vld [vmem:[%s9] sm:$0xf]
    %v476 = vld [vmem:[%s9 + $0x4] sm:$0xf]
    %v477 = vld [vmem:[%s9 + $0x8] sm:$0xf]
    %v478 = vld [vmem:[%s9 + $0xc] sm:$0xf]
    %v479 = vld [vmem:[%s10] sm:$0xf]
    %v480 = vld [vmem:[%s10 + $0x4] sm:$0xf]
    %v481 = vld [vmem:[%s10 + $0x8] sm:$0xf]
    %v482 = vld [vmem:[%s10 + $0xc] sm:$0xf]
    %v487 = vunpack.c.l.b16 %v479
    %v488 = vunpack.c.l.b16 %v480
    %v489 = vunpack.c.l.b16 %v481
    %v490 = vunpack.c.l.b16 %v482
    %v491 = vpack.c.b16 %v488, %v487
    %v492 = vpack.c.b16 %v490, %v489
    %v496 = vsel %vm246, %v432, 0
    %498 = vmatprep.subr.bf16.mxu0 0
    %499 = vmatpush1.bf16.msra.mxu0 %v491
    %500 = vmatprep.subr.bf16.mxu0 0
    %501 = vmatpush1.bf16.msra.mxu0 %v492
    %502 = vmatprep.subr.bf16.mxu0 0
    %503 = vmatpush1.bf16.msra.mxu0 0
    %504 = vmatprep.subr.bf16.mxu0 0
    %505 = vmatpush1.bf16.msra.mxu0 0
    %506 = vmatprep.subr.bf16.mxu0 0
    %507 = vmatpush1.bf16.msra.mxu0 0
    %508 = vmatprep.subr.bf16.mxu0 0
    %509 = vmatpush1.bf16.msra.mxu0 0
    %510 = vmatprep.subr.bf16.mxu0 0
    %511 = vmatpush1.bf16.msra.mxu0 0
    %512 = vmatprep.subr.bf16.mxu0 0
    %513 = vmatpush1.bf16.msra.mxu0 0
    %514 = vmatprep.subr.bf16.mxu0 0
    %515 = vmatpush1.bf16.msra.mxu0 0
    %516 = vmatprep.subr.bf16.mxu0 0
    %517 = vmatpush1.bf16.msra.mxu0 0
    %518 = vmatprep.subr.bf16.mxu0 0
    %519 = vmatpush1.bf16.msra.mxu0 0
    %520 = vmatprep.subr.bf16.mxu0 0
    %521 = vmatpush1.bf16.msra.mxu0 0
    %522 = vmatprep.subr.bf16.mxu0 0
    %523 = vmatpush1.bf16.msra.mxu0 0
    %524 = vmatprep.subr.bf16.mxu0 0
    %525 = vmatpush1.bf16.msra.mxu0 0
    %526 = vmatprep.subr.bf16.mxu0 0
    %527 = vmatpush1.bf16.msra.mxu0 0
    %528 = vmatprep.subr.bf16.mxu0 0
    %529 = vmatpush1.bf16.msra.mxu0 0
    %530 = vmatprep.mubr.bf16.mxu0 0
    %531 = vmatmul.mubr.bf16.gmra.mrb[0].mxu0 %v496
    %v532 = vpop.f32.mrb[0].mxu0
    %v533 = vadd.f32 0.0, %v532
    %v534 = vpop.f32.mrb[0].mxu0
    %v535 = vpop.f32.mrb[0].mxu0
    %v536 = vadd.f32 0.0, %v535
    %v537 = vpop.f32.mrb[0].mxu0
    %538 = vdwg.mxu0
    %v543 = vunpack.c.l.b16 %v475
    %v544 = vunpack.c.l.b16 %v476
    %v545 = vunpack.c.l.b16 %v477
    %v546 = vunpack.c.l.b16 %v478
    %v547 = vpack.c.b16 %v544, %v543
    %v548 = vpack.c.b16 %v546, %v545
    %v552 = vsel %vm246, %v474, 0
    %554 = vmatprep.subr.bf16.mxu0 0
    %555 = vmatpush1.bf16.msra.mxu0 %v547
    %556 = vmatprep.subr.bf16.mxu0 0
    %557 = vmatpush1.bf16.msra.mxu0 %v548
    %558 = vmatprep.subr.bf16.mxu0 0
    %559 = vmatpush1.bf16.msra.mxu0 0
    %560 = vmatprep.subr.bf16.mxu0 0
    %561 = vmatpush1.bf16.msra.mxu0 0
    %562 = vmatprep.subr.bf16.mxu0 0
    %563 = vmatpush1.bf16.msra.mxu0 0
    %564 = vmatprep.subr.bf16.mxu0 0
    %565 = vmatpush1.bf16.msra.mxu0 0
    %566 = vmatprep.subr.bf16.mxu0 0
    %567 = vmatpush1.bf16.msra.mxu0 0
    %568 = vmatprep.subr.bf16.mxu0 0
    %569 = vmatpush1.bf16.msra.mxu0 0
    %570 = vmatprep.subr.bf16.mxu0 0
    %571 = vmatpush1.bf16.msra.mxu0 0
    %572 = vmatprep.subr.bf16.mxu0 0
    %573 = vmatpush1.bf16.msra.mxu0 0
    %574 = vmatprep.subr.bf16.mxu0 0
    %575 = vmatpush1.bf16.msra.mxu0 0
    %576 = vmatprep.subr.bf16.mxu0 0
    %577 = vmatpush1.bf16.msra.mxu0 0
    %578 = vmatprep.subr.bf16.mxu0 0
    %579 = vmatpush1.bf16.msra.mxu0 0
    %580 = vmatprep.subr.bf16.mxu0 0
    %581 = vmatpush1.bf16.msra.mxu0 0
    %582 = vmatprep.subr.bf16.mxu0 0
    %583 = vmatpush1.bf16.msra.mxu0 0
    %584 = vmatprep.subr.bf16.mxu0 0
    %585 = vmatpush1.bf16.msra.mxu0 0
    %586 = vmatprep.mubr.bf16.mxu0 0
    %587 = vmatmul.mubr.bf16.gmra.mrb[0].mxu0 %v552
    %v588 = vpop.f32.mrb[0].mxu0
    %v589 = vadd.f32 %v533, %v588
    %v590 = vpop.f32.mrb[0].mxu0
    %v591 = vpop.f32.mrb[0].mxu0
    %v592 = vadd.f32 %v536, %v591
    %v593 = vpop.f32.mrb[0].mxu0
    %594 = vdwg.mxu0
    %v595 = vld [vmem:[%s11] sm:$0x1]
    %v597 = vlaneseq
    %v598 = vshrl.u32 %v597, 7
    %v599 = vsub.s32 0, %v598
    %v600 = vrot.slane %v595, %v599
    %v602 = vadd.f32 %v589, %v600
    %v603 = vadd.f32 %v592, %v600
    %606 = vrot.lane.b32.xlu0 %v602, 64
    %v607 = vpop.permute.xlu0 %606
    %608 = vrot.lane.b32.xlu0 %v603, 64
    %v609 = vpop.permute.xlu0 %608
    %vm612 = vcmask 785920
    %613 = vst.msk [vmem:[#allocation2] sm:$0xff] %vm612, %v607
    %614 = vst.msk [vmem:[#allocation2 + $0x8] sm:$0xff] %vm612, %v609
    %v615 = vpack.c.bf16 %v603, %v602
    %616 = vmatprep.subr.bf16.mxu0 0
    %617 = vmatpush1.bf16.msra.mxu0 %v615
    %618 = vmatprep.subr.bf16.mxu0 0
    %619 = vmatpush1.bf16.msra.mxu0 0
    %620 = vmatprep.subr.bf16.mxu0 0
    %621 = vmatpush1.bf16.msra.mxu0 0
    %622 = vmatprep.subr.bf16.mxu0 0
    %623 = vmatpush1.bf16.msra.mxu0 0
    %624 = vmatprep.subr.bf16.mxu0 0
    %625 = vmatpush1.bf16.msra.mxu0 0
    %626 = vmatprep.subr.bf16.mxu0 0
    %627 = vmatpush1.bf16.msra.mxu0 0
    %628 = vmatprep.subr.bf16.mxu0 0
    %629 = vmatpush1.bf16.msra.mxu0 0
    %630 = vmatprep.subr.bf16.mxu0 0
    %631 = vmatpush1.bf16.msra.mxu0 0
    %632 = vmatprep.subr.bf16.mxu0 0
    %633 = vmatpush1.bf16.msra.mxu0 0
    %634 = vmatprep.subr.bf16.mxu0 0
    %635 = vmatpush1.bf16.msra.mxu0 0
    %636 = vmatprep.subr.bf16.mxu0 0
    %637 = vmatpush1.bf16.msra.mxu0 0
    %638 = vmatprep.subr.bf16.mxu0 0
    %639 = vmatpush1.bf16.msra.mxu0 0
    %640 = vmatprep.subr.bf16.mxu0 0
    %641 = vmatpush1.bf16.msra.mxu0 0
    %642 = vmatprep.subr.bf16.mxu0 0
    %643 = vmatpush1.bf16.msra.mxu0 0
    %644 = vmatprep.subr.bf16.mxu0 0
    %645 = vmatpush1.bf16.msra.mxu0 0
    %646 = vmatprep.subr.bf16.mxu0 0
    %647 = vmatpush1.bf16.msra.mxu0 0
    %648 = vmatprep.mubr.bf16.mxu0 0
    %649 = vmatmul.mubr.bf16.gmra.mrb[0].mxu0 %v95
    %v650 = vpop.f32.mrb[0].mxu0
    %v651 = vadd.f32 0.0, %v650
    %v652 = vpop.f32.mrb[0].mxu0
    %v653 = vpop.f32.mrb[0].mxu0
    %v654 = vadd.f32 0.0, %v653
    %v655 = vpop.f32.mrb[0].mxu0
    %656 = vdwg.mxu0
    %v657 = vpack.c.bf16 %v654, %v651
    %v658 = vld [vmem:[%s12] sm:$0xf]
    %v659 = vld [vmem:[%s12 + $0x4] sm:$0xf]
    %v660 = vld [vmem:[%s12 + $0x8] sm:$0xf]
    %v661 = vld [vmem:[%s12 + $0xc] sm:$0xf]
    %v662 = vld [vmem:[%s13] sm:$0xf]
    %v663 = vld [vmem:[%s13 + $0x4] sm:$0xf]
    %v664 = vld [vmem:[%s13 + $0x8] sm:$0xf]
    %v665 = vld [vmem:[%s13 + $0xc] sm:$0xf]
    %v670 = vunpack.c.l.b16 %v662
    %v671 = vunpack.c.l.b16 %v663
    %v672 = vunpack.c.l.b16 %v664
    %v673 = vunpack.c.l.b16 %v665
    %v674 = vpack.c.b16 %v671, %v670
    %v675 = vpack.c.b16 %v673, %v672
    %v679 = vsel %vm246, %v615, 0
    %681 = vmatprep.subr.bf16.mxu0 0
    %682 = vmatpush1.bf16.msra.mxu0 %v674
    %683 = vmatprep.subr.bf16.mxu0 0
    %684 = vmatpush1.bf16.msra.mxu0 %v675
    %685 = vmatprep.subr.bf16.mxu0 0
    %686 = vmatpush1.bf16.msra.mxu0 0
    %687 = vmatprep.subr.bf16.mxu0 0
    %688 = vmatpush1.bf16.msra.mxu0 0
    %689 = vmatprep.subr.bf16.mxu0 0
    %690 = vmatpush1.bf16.msra.mxu0 0
    %691 = vmatprep.subr.bf16.mxu0 0
    %692 = vmatpush1.bf16.msra.mxu0 0
    %693 = vmatprep.subr.bf16.mxu0 0
    %694 = vmatpush1.bf16.msra.mxu0 0
    %695 = vmatprep.subr.bf16.mxu0 0
    %696 = vmatpush1.bf16.msra.mxu0 0
    %697 = vmatprep.subr.bf16.mxu0 0
    %698 = vmatpush1.bf16.msra.mxu0 0
    %699 = vmatprep.subr.bf16.mxu0 0
    %700 = vmatpush1.bf16.msra.mxu0 0
    %701 = vmatprep.subr.bf16.mxu0 0
    %702 = vmatpush1.bf16.msra.mxu0 0
    %703 = vmatprep.subr.bf16.mxu0 0
    %704 = vmatpush1.bf16.msra.mxu0 0
    %705 = vmatprep.subr.bf16.mxu0 0
    %706 = vmatpush1.bf16.msra.mxu0 0
    %707 = vmatprep.subr.bf16.mxu0 0
    %708 = vmatpush1.bf16.msra.mxu0 0
    %709 = vmatprep.subr.bf16.mxu0 0
    %710 = vmatpush1.bf16.msra.mxu0 0
    %711 = vmatprep.subr.bf16.mxu0 0
    %712 = vmatpush1.bf16.msra.mxu0 0
    %713 = vmatprep.mubr.bf16.mxu0 0
    %714 = vmatmul.mubr.bf16.gmra.mrb[0].mxu0 %v679
    %v715 = vpop.f32.mrb[0].mxu0
    %v716 = vadd.f32 0.0, %v715
    %v717 = vpop.f32.mrb[0].mxu0
    %v718 = vpop.f32.mrb[0].mxu0
    %v719 = vadd.f32 0.0, %v718
    %v720 = vpop.f32.mrb[0].mxu0
    %721 = vdwg.mxu0
    %v726 = vunpack.c.l.b16 %v658
    %v727 = vunpack.c.l.b16 %v659
    %v728 = vunpack.c.l.b16 %v660
    %v729 = vunpack.c.l.b16 %v661
    %v730 = vpack.c.b16 %v727, %v726
    %v731 = vpack.c.b16 %v729, %v728
    %v735 = vsel %vm246, %v657, 0
    %737 = vmatprep.subr.bf16.mxu0 0
    %738 = vmatpush1.bf16.msra.mxu0 %v730
    %739 = vmatprep.subr.bf16.mxu0 0
    %740 = vmatpush1.bf16.msra.mxu0 %v731
    %741 = vmatprep.subr.bf16.mxu0 0
    %742 = vmatpush1.bf16.msra.mxu0 0
    %743 = vmatprep.subr.bf16.mxu0 0
    %744 = vmatpush1.bf16.msra.mxu0 0
    %745 = vmatprep.subr.bf16.mxu0 0
    %746 = vmatpush1.bf16.msra.mxu0 0
    %747 = vmatprep.subr.bf16.mxu0 0
    %748 = vmatpush1.bf16.msra.mxu0 0
    %749 = vmatprep.subr.bf16.mxu0 0
    %750 = vmatpush1.bf16.msra.mxu0 0
    %751 = vmatprep.subr.bf16.mxu0 0
    %752 = vmatpush1.bf16.msra.mxu0 0
    %753 = vmatprep.subr.bf16.mxu0 0
    %754 = vmatpush1.bf16.msra.mxu0 0
    %755 = vmatprep.subr.bf16.mxu0 0
    %756 = vmatpush1.bf16.msra.mxu0 0
    %757 = vmatprep.subr.bf16.mxu0 0
    %758 = vmatpush1.bf16.msra.mxu0 0
    %759 = vmatprep.subr.bf16.mxu0 0
    %760 = vmatpush1.bf16.msra.mxu0 0
    %761 = vmatprep.subr.bf16.mxu0 0
    %762 = vmatpush1.bf16.msra.mxu0 0
    %763 = vmatprep.subr.bf16.mxu0 0
    %764 = vmatpush1.bf16.msra.mxu0 0
    %765 = vmatprep.subr.bf16.mxu0 0
    %766 = vmatpush1.bf16.msra.mxu0 0
    %767 = vmatprep.subr.bf16.mxu0 0
    %768 = vmatpush1.bf16.msra.mxu0 0
    %769 = vmatprep.mubr.bf16.mxu0 0
    %770 = vmatmul.mubr.bf16.gmra.mrb[0].mxu0 %v735
    %v771 = vpop.f32.mrb[0].mxu0
    %v772 = vadd.f32 %v716, %v771
    %v773 = vpop.f32.mrb[0].mxu0
    %v774 = vpop.f32.mrb[0].mxu0
    %v775 = vadd.f32 %v719, %v774
    %v776 = vpop.f32.mrb[0].mxu0
    %777 = vdwg.mxu0
    %v778 = vld [vmem:[%s14] sm:$0x1]
    %v780 = vlaneseq
    %v781 = vshrl.u32 %v780, 7
    %v782 = vsub.s32 0, %v781
    %v783 = vrot.slane %v778, %v782
    %v785 = vadd.f32 %v772, %v783
    %v786 = vadd.f32 %v775, %v783
    %789 = vrot.lane.b32.xlu0 %v785, 96
    %v790 = vpop.permute.xlu0 %789
    %791 = vrot.lane.b32.xlu0 %v786, 96
    %v792 = vpop.permute.xlu0 %791
    %vm795 = vcmask 1048320
    %796 = vst.msk [vmem:[#allocation2] sm:$0xff] %vm795, %v790
    %797 = vst.msk [vmem:[#allocation2 + $0x8] sm:$0xff] %vm795, %v792
    %v798 = vld [vmem:[%s1] sm:$0x1]
    %v799 = vld [vmem:[#allocation2] sm:$0xff]
    %v800 = vld [vmem:[#allocation2 + $0x8] sm:$0xff]
    %v801 = vpack.c.bf16 %v800, %v799
    %v803 = vsel %vm93, %v798, 0
    %805 = vmatprep.subr.bf16.mxu0 0
    %806 = vmatpush1.bf16.msra.mxu0 %v801
    %807 = vmatprep.subr.bf16.mxu0 0
    %808 = vmatpush1.bf16.msra.mxu0 0
    %809 = vmatprep.subr.bf16.mxu0 0
    %810 = vmatpush1.bf16.msra.mxu0 0
    %811 = vmatprep.subr.bf16.mxu0 0
    %812 = vmatpush1.bf16.msra.mxu0 0
    %813 = vmatprep.subr.bf16.mxu0 0
    %814 = vmatpush1.bf16.msra.mxu0 0
    %815 = vmatprep.subr.bf16.mxu0 0
    %816 = vmatpush1.bf16.msra.mxu0 0
    %817 = vmatprep.subr.bf16.mxu0 0
    %818 = vmatpush1.bf16.msra.mxu0 0
    %819 = vmatprep.subr.bf16.mxu0 0
    %820 = vmatpush1.bf16.msra.mxu0 0
    %821 = vmatprep.subr.bf16.mxu0 0
    %822 = vmatpush1.bf16.msra.mxu0 0
    %823 = vmatprep.subr.bf16.mxu0 0
    %824 = vmatpush1.bf16.msra.mxu0 0
    %825 = vmatprep.subr.bf16.mxu0 0
    %826 = vmatpush1.bf16.msra.mxu0 0
    %827 = vmatprep.subr.bf16.mxu0 0
    %828 = vmatpush1.bf16.msra.mxu0 0
    %829 = vmatprep.subr.bf16.mxu0 0
    %830 = vmatpush1.bf16.msra.mxu0 0
    %831 = vmatprep.subr.bf16.mxu0 0
    %832 = vmatpush1.bf16.msra.mxu0 0
    %833 = vmatprep.subr.bf16.mxu0 0
    %834 = vmatpush1.bf16.msra.mxu0 0
    %835 = vmatprep.subr.bf16.mxu0 0
    %836 = vmatpush1.bf16.msra.mxu0 0
    %837 = vmatprep.mubr.bf16.mxu0 0
    %838 = vmatmul.mubr.bf16.gmra.mrb[0].mxu0 %v803
    %v839 = vpop.f32.mrb[0].mxu0
    %v840 = vadd.f32 0.0, %v839
    %v841 = vpop.f32.mrb[0].mxu0
    %v842 = vpop.f32.mrb[0].mxu0
    %v843 = vpop.f32.mrb[0].mxu0
    %844 = vdwg.mxu0
    %v845 = vpack.c.bf16 %v840, %v840
    %v846 = vld [vmem:[%s15] sm:$0xf]
    %v847 = vld [vmem:[%s15 + $0x4] sm:$0xf]
    %v848 = vld [vmem:[%s15 + $0x8] sm:$0xf]
    %v849 = vld [vmem:[%s15 + $0xc] sm:$0xf]
    %v850 = vld [vmem:[%s15 + $0x10] sm:$0xf]
    %v851 = vld [vmem:[%s15 + $0x14] sm:$0xf]
    %v852 = vld [vmem:[%s15 + $0x18] sm:$0xf]
    %v853 = vld [vmem:[%s15 + $0x1c] sm:$0xf]
    %v854 = vld [vmem:[%s15 + $0x20] sm:$0xf]
    %v855 = vld [vmem:[%s15 + $0x24] sm:$0xf]
    %v856 = vld [vmem:[%s15 + $0x28] sm:$0xf]
    %v857 = vld [vmem:[%s15 + $0x2c] sm:$0xf]
    %v858 = vld [vmem:[%s15 + $0x30] sm:$0xf]
    %v859 = vld [vmem:[%s15 + $0x34] sm:$0xf]
    %v860 = vld [vmem:[%s15 + $0x38] sm:$0xf]
    %v861 = vld [vmem:[%s15 + $0x3c] sm:$0xf]
    %v862 = vld [vmem:[%s16] sm:$0x1]
    %v864 = vlaneseq
    %v865 = vshrl.u32 %v864, 7
    %v866 = vsub.s32 0, %v865
    %v867 = vrot.slane %v862, %v866
    %v885 = vunpack.c.l.b16 %v846
    %v886 = vunpack.c.l.b16 %v847
    %v887 = vunpack.c.l.b16 %v848
    %v888 = vunpack.c.l.b16 %v849
    %v889 = vunpack.c.l.b16 %v850
    %v890 = vunpack.c.l.b16 %v851
    %v891 = vunpack.c.l.b16 %v852
    %v892 = vunpack.c.l.b16 %v853
    %v893 = vunpack.c.l.b16 %v854
    %v894 = vunpack.c.l.b16 %v855
    %v895 = vunpack.c.l.b16 %v856
    %v896 = vunpack.c.l.b16 %v857
    %v897 = vunpack.c.l.b16 %v858
    %v898 = vunpack.c.l.b16 %v859
    %v899 = vunpack.c.l.b16 %v860
    %v900 = vunpack.c.l.b16 %v861
    %v901 = vpack.c.b16 %v886, %v885
    %v902 = vpack.c.b16 %v888, %v887
    %v903 = vpack.c.b16 %v890, %v889
    %v904 = vpack.c.b16 %v892, %v891
    %v905 = vpack.c.b16 %v894, %v893
    %v906 = vpack.c.b16 %v896, %v895
    %v907 = vpack.c.b16 %v898, %v897
    %v908 = vpack.c.b16 %v900, %v899
    %917 = vmatprep.subr.bf16.mxu0 0
    %918 = vmatpush1.bf16.msra.mxu0 %v901
    %919 = vmatprep.subr.bf16.mxu0 0
    %920 = vmatpush1.bf16.msra.mxu0 %v902
    %921 = vmatprep.subr.bf16.mxu0 0
    %922 = vmatpush1.bf16.msra.mxu0 %v903
    %923 = vmatprep.subr.bf16.mxu0 0
    %924 = vmatpush1.bf16.msra.mxu0 %v904
    %925 = vmatprep.subr.bf16.mxu0 0
    %926 = vmatpush1.bf16.msra.mxu0 %v905
    %927 = vmatprep.subr.bf16.mxu0 0
    %928 = vmatpush1.bf16.msra.mxu0 %v906
    %929 = vmatprep.subr.bf16.mxu0 0
    %930 = vmatpush1.bf16.msra.mxu0 %v907
    %931 = vmatprep.subr.bf16.mxu0 0
    %932 = vmatpush1.bf16.msra.mxu0 %v908
    %933 = vmatprep.subr.bf16.mxu0 0
    %934 = vmatpush1.bf16.msra.mxu0 0
    %935 = vmatprep.subr.bf16.mxu0 0
    %936 = vmatpush1.bf16.msra.mxu0 0
    %937 = vmatprep.subr.bf16.mxu0 0
    %938 = vmatpush1.bf16.msra.mxu0 0
    %939 = vmatprep.subr.bf16.mxu0 0
    %940 = vmatpush1.bf16.msra.mxu0 0
    %941 = vmatprep.subr.bf16.mxu0 0
    %942 = vmatpush1.bf16.msra.mxu0 0
    %943 = vmatprep.subr.bf16.mxu0 0
    %944 = vmatpush1.bf16.msra.mxu0 0
    %945 = vmatprep.subr.bf16.mxu0 0
    %946 = vmatpush1.bf16.msra.mxu0 0
    %947 = vmatprep.subr.bf16.mxu0 0
    %948 = vmatpush1.bf16.msra.mxu0 0
    %949 = vmatprep.mubr.bf16.mxu0 0
    %950 = vmatmul.mubr.bf16.gmra.mrb[0].mxu0 %v845
    %v951 = vpop.f32.mrb[0].mxu0
    %v952 = vadd.f32 %v867, %v951
    %v953 = vpop.f32.mrb[0].mxu0
    %v954 = vpop.f32.mrb[0].mxu0
    %v955 = vpop.f32.mrb[0].mxu0
    %956 = vdwg.mxu0
    %v957 = vmax.f32 %v952, 0.0
    %v958 = vpack.c.bf16 %v957, %v957
    %v959 = vld [vmem:[%s17] sm:$0xf]
    %v960 = vld [vmem:[%s17 + $0x4] sm:$0xf]
    %v961 = vld [vmem:[%s17 + $0x8] sm:$0xf]
    %v962 = vld [vmem:[%s17 + $0xc] sm:$0xf]
    %v963 = vld [vmem:[%s18] sm:$0x1]
    %v965 = vlaneseq
    %v966 = vshrl.u32 %v965, 7
    %v967 = vsub.s32 0, %v966
    %v968 = vrot.slane %v963, %v967
    %v974 = vunpack.c.l.b16 %v959
    %v975 = vunpack.c.l.b16 %v960
    %v976 = vunpack.c.l.b16 %v961
    %v977 = vunpack.c.l.b16 %v962
    %v978 = vpack.c.b16 %v975, %v974
    %v979 = vpack.c.b16 %v977, %v976
    %v983 = vsel %vm246, %v958, 0
    %985 = vmatprep.subr.bf16.mxu0 0
    %986 = vmatpush1.bf16.msra.mxu0 %v978
    %987 = vmatprep.subr.bf16.mxu0 0
    %988 = vmatpush1.bf16.msra.mxu0 %v979
    %989 = vmatprep.subr.bf16.mxu0 0
    %990 = vmatpush1.bf16.msra.mxu0 0
    %991 = vmatprep.subr.bf16.mxu0 0
    %992 = vmatpush1.bf16.msra.mxu0 0
    %993 = vmatprep.subr.bf16.mxu0 0
    %994 = vmatpush1.bf16.msra.mxu0 0
    %995 = vmatprep.subr.bf16.mxu0 0
    %996 = vmatpush1.bf16.msra.mxu0 0
    %997 = vmatprep.subr.bf16.mxu0 0
    %998 = vmatpush1.bf16.msra.mxu0 0
    %999 = vmatprep.subr.bf16.mxu0 0
    %1000 = vmatpush1.bf16.msra.mxu0 0
    %1001 = vmatprep.subr.bf16.mxu0 0
    %1002 = vmatpush1.bf16.msra.mxu0 0
    %1003 = vmatprep.subr.bf16.mxu0 0
    %1004 = vmatpush1.bf16.msra.mxu0 0
    %1005 = vmatprep.subr.bf16.mxu0 0
    %1006 = vmatpush1.bf16.msra.mxu0 0
    %1007 = vmatprep.subr.bf16.mxu0 0
    %1008 = vmatpush1.bf16.msra.mxu0 0
    %1009 = vmatprep.subr.bf16.mxu0 0
    %1010 = vmatpush1.bf16.msra.mxu0 0
    %1011 = vmatprep.subr.bf16.mxu0 0
    %1012 = vmatpush1.bf16.msra.mxu0 0
    %1013 = vmatprep.subr.bf16.mxu0 0
    %1014 = vmatpush1.bf16.msra.mxu0 0
    %1015 = vmatprep.subr.bf16.mxu0 0
    %1016 = vmatpush1.bf16.msra.mxu0 0
    %1017 = vmatprep.mubr.bf16.mxu0 0
    %1018 = vmatmul.mubr.bf16.gmra.mrb[0].mxu0 %v983
    %v1019 = vpop.f32.mrb[0].mxu0
    %v1020 = vadd.f32 %v968, %v1019
    %v1021 = vpop.f32.mrb[0].mxu0
    %v1022 = vpop.f32.mrb[0].mxu0
    %v1023 = vpop.f32.mrb[0].mxu0
    %1024 = vdwg.mxu0
    %vm1025 = vcmask 25600
    %1026 = vst.msk [vmem:[#allocation6] sm:$0x3] %vm1025, %v1020
    // Predicated region
    $region82: #{tpu_custom_call.1} parent=1 // pred_check
      _
    $region83: #{tpu_custom_call.1} parent=1 // pred_check_branch
      %1028 = sbr.rel (0) target = $region85
    $region84: #{tpu_custom_call.1} parent=1 // pred_region
      %s1030 = ssub.s32 32, 32
      %1031 = vsyncadd [#allocation5], %s1030
      %s1033 = sshll.u32 [#allocation6], 4
      %s1034 = int_to_ptr.vmem [resolvable:$true] %s1033
      %1036 = dma.vmem_to_hbm [thread:$0]  %s1034, 32, %s19, [#allocation5]
    $region85: #{tpu_custom_call.1} parent=1 // pred_fallthru
      _
    // Predicated region
    $region86: #{tpu_custom_call.1} parent=1 // pred_check
      _
    $region87: #{tpu_custom_call.1} parent=1 // pred_check_branch
      %1038 = sbr.rel (0) target = $region89
    $region88: #{tpu_custom_call.1} parent=1 // pred_region
      %1039 = dma.done [#allocation5], 32
    $region89: #{tpu_custom_call.1} parent=1 // pred_fallthru
      _
    %1040 = vsyncpa [#allocation4], 1
    %1041 = vsyncpa [#allocation5], 1

</llo_original>
